<compile_context>
chip_gen: v7x
topology: tpu7x:2x2x1
jax: 0.10.0
libtpu: 0.0.40
codegen_flags: <defaults>
</compile_context>

<pallas_src>
import jax
import jax.numpy as jnp
from jax.experimental import pallas as pl
from jax.experimental.pallas import tpu as pltpu


# Target number of f32 spatial "lanes" (pixels) moved per grid step.
# At C=4 in / O=3 out this is ~3.5 MiB of HBM traffic per step and ~7 MiB of
# double-buffered VMEM: large enough to hide per-step overhead, small enough
# for v5e's 16 MiB default scoped VMEM and v7x's 32 MiB.
_TARGET_LANES = 128 * 1024


def _outconv_kernel(w_ref, x_ref, o_ref):
    """out[b, oc, ...] = sum_ic w[oc, ic] * x[b, ic, ...]  (VPU only, no MXU).

    w_ref: (O, C) weights in SMEM (scalar reads, broadcast on the VPU).
    x_ref: (Nb, C, ...) activation block in VMEM (trailing dims lane-dense).
    o_ref: (Nb, O, ...) output block in VMEM.
    """
    out_ch, in_ch = w_ref.shape          # static Python ints
    x = x_ref[...]
    for oc in range(out_ch):
        acc = w_ref[oc, 0] * x[:, 0]
        for ic in range(1, in_ch):
            acc = acc + w_ref[oc, ic] * x[:, ic]
        o_ref[:, oc] = acc.astype(o_ref.dtype)


def out_conv(x_nchw, weight_ockk, *, target_lanes=_TARGET_LANES):
    """1x1 conv, bias=False (torch.nn.Conv2d(in, out, kernel_size=1, bias=False)).

    x_nchw:      (N, C, H, W)   float32
    weight_ockk: (O, C, 1, 1)   float32   (torch Conv2d weight layout)
    returns:     (N, O, H, W)   float32
    """
    n, c, h, w = x_nchw.shape
    o = weight_ockk.shape[0]
    hw = h * w

    w_mat = weight_ockk.reshape(o, c).astype(x_nchw.dtype)   # (O, C) -> SMEM

    cost = pl.CostEstimate(
        flops=2 * n * o * c * hw,
        transcendentals=0,
        bytes_accessed=int(x_nchw.dtype.itemsize) * ((c + o) * n * hw + o * c),
    )
    compiler_params = pltpu.CompilerParams(
        dimension_semantics=("parallel", "parallel"),
    )

    if hw % 128 == 0:
        # Sublane-dense path: spatial axis viewed as (S, 128); each channel's
        # block is a dense (St, 128) slab -> full (8,128) tiles, unmasked vst.
        s = hw // 128
        if s * 128 >= target_lanes:
            st = max(8, (target_lanes // 128) // 8 * 8)   # multiple of 8
            nb = 1
        else:
            st = s                                        # full spatial extent
            nb = max(1, min(n, target_lanes // (s * 128)))
        grid = (pl.cdiv(s, st), pl.cdiv(n, nb))           # spatial axis first
        x_view = x_nchw.reshape(n, c, s, 128)             # free reshape
        in_spec = pl.BlockSpec((nb, c, st, 128), lambda j, b: (b, 0, j, 0))
        out_spec = pl.BlockSpec((nb, o, st, 128), lambda j, b: (b, 0, j, 0))
        out_shape = jax.ShapeDtypeStruct((n, o, s, 128), x_nchw.dtype)
    else:
        # Ragged fallback: (N, C, HW) with a lane tile; boundary blocks are
        # clipped by Pallas (no wrapper pad / slice HBM passes).
        if hw >= target_lanes:
            mt = target_lanes                             # multiple of 128
            nb = 1
        else:
            mt = hw                                       # full spatial extent
            nb = max(1, min(n, target_lanes // hw))
        grid = (pl.cdiv(hw, mt), pl.cdiv(n, nb))
        x_view = x_nchw.reshape(n, c, hw)                 # free reshape
        in_spec = pl.BlockSpec((nb, c, mt), lambda j, b: (b, 0, j))
        out_spec = pl.BlockSpec((nb, o, mt), lambda j, b: (b, 0, j))
        out_shape = jax.ShapeDtypeStruct((n, o, hw), x_nchw.dtype)

    out = pl.pallas_call(
        _outconv_kernel,
        out_shape=out_shape,
        grid_spec=pltpu.PrefetchScalarGridSpec(
            num_scalar_prefetch=0,
            grid=grid,
            in_specs=[
                # Tiny (O, C) weight table lives in SMEM for the whole kernel.
                pl.BlockSpec(memory_space=pltpu.MemorySpace.SMEM),
                in_spec,
            ],
            out_specs=out_spec,
        ),
        compiler_params=compiler_params,
        cost_estimate=cost,
    )(w_mat, x_view)

    # (N, O, S, 128) / (N, O, HW) -> (N, O, H, W): free reshape, no transpose.
    return out.reshape(n, o, h, w)


if __name__ == "__main__":
    # Small shapes consistent with OutConv: in_channels=4, out_channels=3.
    N, C_IN, C_OUT, H, W = 2, 4, 3, 16, 16

    key = jax.random.PRNGKey(0)
    kx, kw = jax.random.split(key)
    x = jax.random.normal(kx, (N, C_IN, H, W), dtype=jnp.float32)
    # Deterministic weight init (Conv2d weight shape: (out_ch, in_ch, 1, 1)).
    weight = jax.random.normal(kw, (C_OUT, C_IN, 1, 1), dtype=jnp.float32) * 0.1

    y = out_conv(x, weight)
    jax.block_until_ready(y)

    # Reference check (pure JAX 1x1 conv == channel contraction).
    y_ref = jnp.einsum("nchw,oc->nohw", x, weight.reshape(C_OUT, C_IN))
    assert y.shape == (N, C_OUT, H, W)
    assert jnp.allclose(y, y_ref, atol=1e-5, rtol=1e-5)

    print("KERNEL_OK")
</pallas_src>

<mosaic_0001>
module attributes {stable_mosaic.version = 11 : i64} {
  func.func @_outconv_kernel(%arg0: i32, %arg1: i32, %arg2: memref<3x4xf32, #tpu.memory_space<smem>>, %arg3: memref<2x4x2x128xf32, #tpu.memory_space<vmem>>, %arg4: memref<2x3x2x128xf32, #tpu.memory_space<vmem>>) attributes {dimension_semantics = [#tpu.dimension_semantics<parallel>, #tpu.dimension_semantics<parallel>], iteration_bounds = array<i64: 1, 1>, scalar_prefetch = 0 : i64, scratch_operands = 0 : i64, tpu.core_type = #tpu.core_type<tc>, window_params = [{transform_indices = @transform_0, window_bounds = array<i64: 3, 4>}, {transform_indices = @transform_1, window_bounds = array<i64: 2, 4, 2, 128>}, {transform_indices = @transform_2, window_bounds = array<i64: 2, 3, 2, 128>}]} {
    %c0 = arith.constant 0 : index
    %c0_0 = arith.constant 0 : index
    %c0_1 = arith.constant 0 : index
    %c0_2 = arith.constant 0 : index
    %0 = vector.load %arg3[%c0, %c0_0, %c0_1, %c0_2] : memref<2x4x2x128xf32, #tpu.memory_space<vmem>>, vector<2x4x2x128xf32>
    %c0_3 = arith.constant 0 : index
    %c0_4 = arith.constant 0 : index
    %1 = memref.load %arg2[%c0_3, %c0_4] : memref<3x4xf32, #tpu.memory_space<smem>>
    %2 = vector.extract_strided_slice %0 {offsets = [0, 0, 0, 0], sizes = [2, 1, 2, 128], strides = [1, 1, 1, 1]} : vector<2x4x2x128xf32> to vector<2x1x2x128xf32>
    %3 = vector.shape_cast %2 : vector<2x1x2x128xf32> to vector<2x2x128xf32>
    %4 = vector.broadcast %1 : f32 to vector<2x2x128xf32>
    %5 = arith.mulf %4, %3 : vector<2x2x128xf32>
    %c0_5 = arith.constant 0 : index
    %c1 = arith.constant 1 : index
    %6 = memref.load %arg2[%c0_5, %c1] : memref<3x4xf32, #tpu.memory_space<smem>>
    %7 = vector.extract_strided_slice %0 {offsets = [0, 1, 0, 0], sizes = [2, 1, 2, 128], strides = [1, 1, 1, 1]} : vector<2x4x2x128xf32> to vector<2x1x2x128xf32>
    %8 = vector.shape_cast %7 : vector<2x1x2x128xf32> to vector<2x2x128xf32>
    %9 = vector.broadcast %6 : f32 to vector<2x2x128xf32>
    %10 = arith.mulf %9, %8 : vector<2x2x128xf32>
    %11 = arith.addf %5, %10 : vector<2x2x128xf32>
    %c0_6 = arith.constant 0 : index
    %c2 = arith.constant 2 : index
    %12 = memref.load %arg2[%c0_6, %c2] : memref<3x4xf32, #tpu.memory_space<smem>>
    %13 = vector.extract_strided_slice %0 {offsets = [0, 2, 0, 0], sizes = [2, 1, 2, 128], strides = [1, 1, 1, 1]} : vector<2x4x2x128xf32> to vector<2x1x2x128xf32>
    %14 = vector.shape_cast %13 : vector<2x1x2x128xf32> to vector<2x2x128xf32>
    %15 = vector.broadcast %12 : f32 to vector<2x2x128xf32>
    %16 = arith.mulf %15, %14 : vector<2x2x128xf32>
    %17 = arith.addf %11, %16 : vector<2x2x128xf32>
    %c0_7 = arith.constant 0 : index
    %c3 = arith.constant 3 : index
    %18 = memref.load %arg2[%c0_7, %c3] : memref<3x4xf32, #tpu.memory_space<smem>>
    %19 = vector.extract_strided_slice %0 {offsets = [0, 3, 0, 0], sizes = [2, 1, 2, 128], strides = [1, 1, 1, 1]} : vector<2x4x2x128xf32> to vector<2x1x2x128xf32>
    %20 = vector.shape_cast %19 : vector<2x1x2x128xf32> to vector<2x2x128xf32>
    %21 = vector.broadcast %18 : f32 to vector<2x2x128xf32>
    %22 = arith.mulf %21, %20 : vector<2x2x128xf32>
    %23 = arith.addf %17, %22 : vector<2x2x128xf32>
    %c0_8 = arith.constant 0 : index
    %c0_9 = arith.constant 0 : index
    %c0_10 = arith.constant 0 : index
    %c0_11 = arith.constant 0 : index
    %24 = vector.load %arg4[%c0_8, %c0_9, %c0_10, %c0_11] : memref<2x3x2x128xf32, #tpu.memory_space<vmem>>, vector<2x1x2x128xf32>
    %25 = vector.shape_cast %24 : vector<2x1x2x128xf32> to vector<2x2x128xf32>
    %26 = vector.shape_cast %23 : vector<2x2x128xf32> to vector<2x1x2x128xf32>
    tpu.vector_store %arg4[%c0_8, %c0_9, %c0_10, %c0_11], %26 {strides = array<i32>} : memref<2x3x2x128xf32, #tpu.memory_space<vmem>>, vector<2x1x2x128xf32>,
    %c1_12 = arith.constant 1 : index
    %c0_13 = arith.constant 0 : index
    %27 = memref.load %arg2[%c1_12, %c0_13] : memref<3x4xf32, #tpu.memory_space<smem>>
    %28 = vector.extract_strided_slice %0 {offsets = [0, 0, 0, 0], sizes = [2, 1, 2, 128], strides = [1, 1, 1, 1]} : vector<2x4x2x128xf32> to vector<2x1x2x128xf32>
    %29 = vector.shape_cast %28 : vector<2x1x2x128xf32> to vector<2x2x128xf32>
    %30 = vector.broadcast %27 : f32 to vector<2x2x128xf32>
    %31 = arith.mulf %30, %29 : vector<2x2x128xf32>
    %c1_14 = arith.constant 1 : index
    %c1_15 = arith.constant 1 : index
    %32 = memref.load %arg2[%c1_14, %c1_15] : memref<3x4xf32, #tpu.memory_space<smem>>
    %33 = vector.extract_strided_slice %0 {offsets = [0, 1, 0, 0], sizes = [2, 1, 2, 128], strides = [1, 1, 1, 1]} : vector<2x4x2x128xf32> to vector<2x1x2x128xf32>
    %34 = vector.shape_cast %33 : vector<2x1x2x128xf32> to vector<2x2x128xf32>
    %35 = vector.broadcast %32 : f32 to vector<2x2x128xf32>
    %36 = arith.mulf %35, %34 : vector<2x2x128xf32>
    %37 = arith.addf %31, %36 : vector<2x2x128xf32>
    %c1_16 = arith.constant 1 : index
    %c2_17 = arith.constant 2 : index
    %38 = memref.load %arg2[%c1_16, %c2_17] : memref<3x4xf32, #tpu.memory_space<smem>>
    %39 = vector.extract_strided_slice %0 {offsets = [0, 2, 0, 0], sizes = [2, 1, 2, 128], strides = [1, 1, 1, 1]} : vector<2x4x2x128xf32> to vector<2x1x2x128xf32>
    %40 = vector.shape_cast %39 : vector<2x1x2x128xf32> to vector<2x2x128xf32>
    %41 = vector.broadcast %38 : f32 to vector<2x2x128xf32>
    %42 = arith.mulf %41, %40 : vector<2x2x128xf32>
    %43 = arith.addf %37, %42 : vector<2x2x128xf32>
    %c1_18 = arith.constant 1 : index
    %c3_19 = arith.constant 3 : index
    %44 = memref.load %arg2[%c1_18, %c3_19] : memref<3x4xf32, #tpu.memory_space<smem>>
    %45 = vector.extract_strided_slice %0 {offsets = [0, 3, 0, 0], sizes = [2, 1, 2, 128], strides = [1, 1, 1, 1]} : vector<2x4x2x128xf32> to vector<2x1x2x128xf32>
    %46 = vector.shape_cast %45 : vector<2x1x2x128xf32> to vector<2x2x128xf32>
    %47 = vector.broadcast %44 : f32 to vector<2x2x128xf32>
    %48 = arith.mulf %47, %46 : vector<2x2x128xf32>
    %49 = arith.addf %43, %48 : vector<2x2x128xf32>
    %c0_20 = arith.constant 0 : index
    %c1_21 = arith.constant 1 : index
    %c0_22 = arith.constant 0 : index
    %c0_23 = arith.constant 0 : index
    %50 = vector.load %arg4[%c0_20, %c1_21, %c0_22, %c0_23] : memref<2x3x2x128xf32, #tpu.memory_space<vmem>>, vector<2x1x2x128xf32>
    %51 = vector.shape_cast %50 : vector<2x1x2x128xf32> to vector<2x2x128xf32>
    %52 = vector.shape_cast %49 : vector<2x2x128xf32> to vector<2x1x2x128xf32>
    tpu.vector_store %arg4[%c0_20, %c1_21, %c0_22, %c0_23], %52 {strides = array<i32>} : memref<2x3x2x128xf32, #tpu.memory_space<vmem>>, vector<2x1x2x128xf32>,
    %c2_24 = arith.constant 2 : index
    %c0_25 = arith.constant 0 : index
    %53 = memref.load %arg2[%c2_24, %c0_25] : memref<3x4xf32, #tpu.memory_space<smem>>
    %54 = vector.extract_strided_slice %0 {offsets = [0, 0, 0, 0], sizes = [2, 1, 2, 128], strides = [1, 1, 1, 1]} : vector<2x4x2x128xf32> to vector<2x1x2x128xf32>
    %55 = vector.shape_cast %54 : vector<2x1x2x128xf32> to vector<2x2x128xf32>
    %56 = vector.broadcast %53 : f32 to vector<2x2x128xf32>
    %57 = arith.mulf %56, %55 : vector<2x2x128xf32>
    %c2_26 = arith.constant 2 : index
    %c1_27 = arith.constant 1 : index
    %58 = memref.load %arg2[%c2_26, %c1_27] : memref<3x4xf32, #tpu.memory_space<smem>>
    %59 = vector.extract_strided_slice %0 {offsets = [0, 1, 0, 0], sizes = [2, 1, 2, 128], strides = [1, 1, 1, 1]} : vector<2x4x2x128xf32> to vector<2x1x2x128xf32>
    %60 = vector.shape_cast %59 : vector<2x1x2x128xf32> to vector<2x2x128xf32>
    %61 = vector.broadcast %58 : f32 to vector<2x2x128xf32>
    %62 = arith.mulf %61, %60 : vector<2x2x128xf32>
    %63 = arith.addf %57, %62 : vector<2x2x128xf32>
    %c2_28 = arith.constant 2 : index
    %c2_29 = arith.constant 2 : index
    %64 = memref.load %arg2[%c2_28, %c2_29] : memref<3x4xf32, #tpu.memory_space<smem>>
    %65 = vector.extract_strided_slice %0 {offsets = [0, 2, 0, 0], sizes = [2, 1, 2, 128], strides = [1, 1, 1, 1]} : vector<2x4x2x128xf32> to vector<2x1x2x128xf32>
    %66 = vector.shape_cast %65 : vector<2x1x2x128xf32> to vector<2x2x128xf32>
    %67 = vector.broadcast %64 : f32 to vector<2x2x128xf32>
    %68 = arith.mulf %67, %66 : vector<2x2x128xf32>
    %69 = arith.addf %63, %68 : vector<2x2x128xf32>
    %c2_30 = arith.constant 2 : index
    %c3_31 = arith.constant 3 : index
    %70 = memref.load %arg2[%c2_30, %c3_31] : memref<3x4xf32, #tpu.memory_space<smem>>
    %71 = vector.extract_strided_slice %0 {offsets = [0, 3, 0, 0], sizes = [2, 1, 2, 128], strides = [1, 1, 1, 1]} : vector<2x4x2x128xf32> to vector<2x1x2x128xf32>
    %72 = vector.shape_cast %71 : vector<2x1x2x128xf32> to vector<2x2x128xf32>
    %73 = vector.broadcast %70 : f32 to vector<2x2x128xf32>
    %74 = arith.mulf %73, %72 : vector<2x2x128xf32>
    %75 = arith.addf %69, %74 : vector<2x2x128xf32>
    %c0_32 = arith.constant 0 : index
    %c2_33 = arith.constant 2 : index
    %c0_34 = arith.constant 0 : index
    %c0_35 = arith.constant 0 : index
    %76 = vector.load %arg4[%c0_32, %c2_33, %c0_34, %c0_35] : memref<2x3x2x128xf32, #tpu.memory_space<vmem>>, vector<2x1x2x128xf32>
    %77 = vector.shape_cast %76 : vector<2x1x2x128xf32> to vector<2x2x128xf32>
    %78 = vector.shape_cast %75 : vector<2x2x128xf32> to vector<2x1x2x128xf32>
    tpu.vector_store %arg4[%c0_32, %c2_33, %c0_34, %c0_35], %78 {strides = array<i32>} : memref<2x3x2x128xf32, #tpu.memory_space<vmem>>, vector<2x1x2x128xf32>,
    return
  }
  func.func @transform_0(%arg0: i32, %arg1: i32) -> (i32, i32) {
    %c0_i32 = arith.constant 0 : i32
    %c0_i32_0 = arith.constant 0 : i32
    %c0_i32_1 = arith.constant 0 : i32
    return %c0_i32, %c0_i32_0 : i32, i32
  }
  func.func @transform_1(%arg0: i32, %arg1: i32) -> (i32, i32, i32, i32) {
    %c0_i32 = arith.constant 0 : i32
    %c0_i32_0 = arith.constant 0 : i32
    %c0_i32_1 = arith.constant 0 : i32
    return %arg1, %c0_i32, %arg0, %c0_i32_0 : i32, i32, i32, i32
  }
  func.func @transform_2(%arg0: i32, %arg1: i32) -> (i32, i32, i32, i32) {
    %c0_i32 = arith.constant 0 : i32
    %c0_i32_0 = arith.constant 0 : i32
    %c0_i32_1 = arith.constant 0 : i32
    return %arg1, %c0_i32, %arg0, %c0_i32_0 : i32, i32, i32, i32
  }
}

</mosaic_0001>

<llo_original>
// kernel: tpu_custom_call.1
$region0: #{tpu_custom_call.1}
  #allocation0 [shape = 'u32[]', space=smem, size = 0x4, offset = 0x4, fixed_abs, tag = 'smem constant byte address 0x4 - core index']
  #allocation1 [shape = 'u32[144,128]{1,0:T(1,128)}', space=vmem, size = 0x12000, scoped, tag = 'internal scratch']
  %s0 = inlined_call_operand.hbm [shape: f32[3,4], index: 0, kind: input, shape index: {}]
  %s1 = inlined_call_operand.hbm [shape: f32[2,4,2,128], index: 1, kind: input, shape index: {}]
  %s2 = inlined_call_operand.hbm [shape: f32[2,3,2,128], index: 2, kind: output, shape index: {}]
  %s3 = sld [smem:[#allocation0]]
  $region26: #{tpu_custom_call.1} parent=0
    _
  %s5 = ssub.s32 1, %s3
  %s6 = scalar_select 0, %s5, %s3
  $region1: #{tpu_custom_call.1} parent=0
    #allocation2 [shape = 'u8[2048]{0}', space=smem, size = 0x800, scoped, tag = 'input window, operand 0, single buffered']
    #allocation3 [shape = 's32[1]{0}', space=sflag, size = 0x4, scoped, tag = 'scoped memory for tpu_custom_call.1']
    #allocation4 [shape = 's32[1]{0}', space=sflag, size = 0x4, scoped, tag = 'scoped memory for tpu_custom_call.1']
    #allocation5 [shape = 's32[1]{0}', space=sflag, size = 0x4, scoped, tag = 'scoped memory for tpu_custom_call.1']
    #allocation6 [shape = 'u8[8192]{0}', space=vmem, size = 0x2000, scoped, tag = 'input window, operand 1, single buffered']
    #allocation7 [shape = 'u8[6144]{0}', space=vmem, size = 0x1800, scoped, tag = 'output window, operand 0, single buffered']
    %7 = vsyncpa [#allocation5], 0
    %8 = vsyncpa [#allocation3], 0
    %9 = vsyncpa [#allocation4], 0
    // Predicated region
    $region2: #{tpu_custom_call.1} parent=1 // pred_check
      _
    $region3: #{tpu_custom_call.1} parent=1 // pred_check_branch
      %11 = sbr.rel (0) target = $region5
    $region4: #{tpu_custom_call.1} parent=1 // pred_region
      %s13 = ssub.s32 64, 64
      %14 = vsyncadd [#allocation5], %s13
      %17 = dma.hbm_to_smem %s0, 64, [#allocation2], [#allocation5]
    $region5: #{tpu_custom_call.1} parent=1 // pred_fallthru
      _
    // Predicated region
    $region6: #{tpu_custom_call.1} parent=1 // pred_check
      _
    $region7: #{tpu_custom_call.1} parent=1 // pred_check_branch
      %19 = sbr.rel (0) target = $region9
    $region8: #{tpu_custom_call.1} parent=1 // pred_region
      %s21 = ssub.s32 256, 256
      %22 = vsyncadd [#allocation3], %s21
      %s23 = sshll.u32 [#allocation6], 4
      %s24 = int_to_ptr.vmem [resolvable:$true] %s23
      %29 = dma.hbm_to_vmem [thread:$0]  %s1, 256, %s24, [#allocation3], 32, 32, 2
    $region9: #{tpu_custom_call.1} parent=1 // pred_fallthru
      _
    // Predicated region
    $region10: #{tpu_custom_call.1} parent=1 // pred_check
      _
    $region11: #{tpu_custom_call.1} parent=1 // pred_check_branch
      %31 = sbr.rel (0) target = $region13
    $region12: #{tpu_custom_call.1} parent=1 // pred_region
      %32 = dma.done [#allocation5], 64
    $region13: #{tpu_custom_call.1} parent=1 // pred_fallthru
      _
    // Predicated region
    $region14: #{tpu_custom_call.1} parent=1 // pred_check
      _
    $region15: #{tpu_custom_call.1} parent=1 // pred_check_branch
      %34 = sbr.rel (0) target = $region17
    $region16: #{tpu_custom_call.1} parent=1 // pred_region
      %35 = dma.done [#allocation3], 256
    $region17: #{tpu_custom_call.1} parent=1 // pred_fallthru
      _
    %36 = sfence
    %v37 = vld [vmem:[#allocation6] sm:$0x3]
    %v38 = vld [vmem:[#allocation6 + $0x2] sm:$0x3]
    %v39 = vld [vmem:[#allocation6 + $0x4] sm:$0x3]
    %v40 = vld [vmem:[#allocation6 + $0x6] sm:$0x3]
    %v41 = vld [vmem:[#allocation6 + $0x8] sm:$0x3]
    %v42 = vld [vmem:[#allocation6 + $0xa] sm:$0x3]
    %v43 = vld [vmem:[#allocation6 + $0xc] sm:$0x3]
    %v44 = vld [vmem:[#allocation6 + $0xe] sm:$0x3]
    %s45 = sld [smem:[#allocation2]]
    %v46 = vstv %s45
    %v47 = vmul.f32 %v46, %v37
    %v48 = vmul.f32 %v46, %v41
    %s49 = sld [smem:[#allocation2 + $0x1]]
    %v50 = vstv %s49
    %v51 = vmul.f32 %v50, %v38
    %v52 = vmul.f32 %v50, %v42
    %v53 = vadd.f32 %v47, %v51
    %v54 = vadd.f32 %v48, %v52
    %s55 = sld [smem:[#allocation2 + $0x2]]
    %v56 = vstv %s55
    %v57 = vmul.f32 %v56, %v39
    %v58 = vmul.f32 %v56, %v43
    %v59 = vadd.f32 %v53, %v57
    %v60 = vadd.f32 %v54, %v58
    %s61 = sld [smem:[#allocation2 + $0x3]]
    %v62 = vstv %s61
    %v63 = vmul.f32 %v62, %v40
    %v64 = vmul.f32 %v62, %v44
    %v65 = vadd.f32 %v59, %v63
    %v66 = vadd.f32 %v60, %v64
    %67 = vst [vmem:[#allocation7] sm:$0x3] %v65
    %68 = vst [vmem:[#allocation7 + $0x6] sm:$0x3] %v66
    %s69 = sld [smem:[#allocation2 + $0x80]]
    %v70 = vstv %s69
    %v71 = vmul.f32 %v70, %v37
    %v72 = vmul.f32 %v70, %v41
    %s73 = sld [smem:[#allocation2 + $0x81]]
    %v74 = vstv %s73
    %v75 = vmul.f32 %v74, %v38
    %v76 = vmul.f32 %v74, %v42
    %v77 = vadd.f32 %v71, %v75
    %v78 = vadd.f32 %v72, %v76
    %s79 = sld [smem:[#allocation2 + $0x82]]
    %v80 = vstv %s79
    %v81 = vmul.f32 %v80, %v39
    %v82 = vmul.f32 %v80, %v43
    %v83 = vadd.f32 %v77, %v81
    %v84 = vadd.f32 %v78, %v82
    %s85 = sld [smem:[#allocation2 + $0x83]]
    %v86 = vstv %s85
    %v87 = vmul.f32 %v86, %v40
    %v88 = vmul.f32 %v86, %v44
    %v89 = vadd.f32 %v83, %v87
    %v90 = vadd.f32 %v84, %v88
    %s91 = scalar_lea.vmem [#allocation7], 2
    %92 = vst [vmem:[%s91] sm:$0x3] %v89
    %93 = vst [vmem:[%s91 + $0x6] sm:$0x3] %v90
    %s94 = sld [smem:[#allocation2 + $0x100]]
    %v95 = vstv %s94
    %v96 = vmul.f32 %v95, %v37
    %v97 = vmul.f32 %v95, %v41
    %s98 = sld [smem:[#allocation2 + $0x101]]
    %v99 = vstv %s98
    %v100 = vmul.f32 %v99, %v38
    %v101 = vmul.f32 %v99, %v42
    %v102 = vadd.f32 %v96, %v100
    %v103 = vadd.f32 %v97, %v101
    %s104 = sld [smem:[#allocation2 + $0x102]]
    %v105 = vstv %s104
    %v106 = vmul.f32 %v105, %v39
    %v107 = vmul.f32 %v105, %v43
    %v108 = vadd.f32 %v102, %v106
    %v109 = vadd.f32 %v103, %v107
    %s110 = sld [smem:[#allocation2 + $0x103]]
    %v111 = vstv %s110
    %v112 = vmul.f32 %v111, %v40
    %v113 = vmul.f32 %v111, %v44
    %v114 = vadd.f32 %v108, %v112
    %v115 = vadd.f32 %v109, %v113
    %s116 = scalar_lea.vmem [#allocation7], 4
    %117 = vst [vmem:[%s116] sm:$0x3] %v114
    %118 = vst [vmem:[%s116 + $0x6] sm:$0x3] %v115
    // Predicated region
    $region18: #{tpu_custom_call.1} parent=1 // pred_check
      _
    $region19: #{tpu_custom_call.1} parent=1 // pred_check_branch
      %120 = sbr.rel (0) target = $region21
    $region20: #{tpu_custom_call.1} parent=1 // pred_region
      %s122 = ssub.s32 192, 192
      %123 = vsyncadd [#allocation4], %s122
      %s124 = sshll.u32 [#allocation7], 4
      %s125 = int_to_ptr.vmem [resolvable:$true] %s124
      %130 = dma.vmem_to_hbm [thread:$0]  %s125, 192, %s2, [#allocation4], 32, 32, 2
    $region21: #{tpu_custom_call.1} parent=1 // pred_fallthru
      _
    // Predicated region
    $region22: #{tpu_custom_call.1} parent=1 // pred_check
      _
    $region23: #{tpu_custom_call.1} parent=1 // pred_check_branch
      %132 = sbr.rel (0) target = $region25
    $region24: #{tpu_custom_call.1} parent=1 // pred_region
      %133 = dma.done [#allocation4], 192
    $region25: #{tpu_custom_call.1} parent=1 // pred_fallthru
      _
    %134 = vsyncpa [#allocation3], 1
    %135 = vsyncpa [#allocation4], 1
    %136 = vsyncpa [#allocation5], 1

</llo_original>
